<compile_context>
chip_gen: v6e
topology: v6e:2x2x1
jax: 0.10.0
libtpu: 0.0.40
codegen_flags: <defaults>
</compile_context>

<pallas_src>
import jax
import jax.numpy as jnp
from jax.experimental import pallas as pl
from jax.experimental.pallas import tpu as pltpu

LANE = 128


def channel_attention(x_nchw, conv1_w, conv2_w, *, max_tile_hw=2048):
    """x_nchw: (B, C, H, W); conv1_w: (Cmid, 2C, 1, 1); conv2_w: (C, Cmid, 1, 1)."""
    B, C, H, W = x_nchw.shape
    Cmid = conv1_w.shape[0]
    HW = H * W

    x_flat = x_nchw.reshape(B, C, HW)                 # free reshape (view)
    w1 = conv1_w.reshape(Cmid, 2 * C)
    w1a, w1b = w1[:, :C], w1[:, C:]                   # split the channel concat
    w2 = conv2_w.reshape(C, Cmid)

    # ---- tile sizing -------------------------------------------------------
    itemsize = jnp.dtype(x_nchw.dtype).itemsize
    hw_padded = pl.cdiv(HW, LANE) * LANE
    # ~2 MiB per (1, C, tile_hw) input buffer; x2 (double buffer) stays well
    # under the v5e 16 MiB scoped default and v7x's 64 MiB physical VMEM.
    budget_bytes = 2 * 1024 * 1024
    tile_cap = max(LANE, (budget_bytes // max(1, C * itemsize)) // LANE * LANE)
    tile_hw = int(min(hw_padded, tile_cap, max_tile_hw))
    grid_hw = pl.cdiv(HW, tile_hw)
    num_chunks = tile_hw // LANE                      # static unroll count
    needs_mask = (HW % tile_hw) != 0                  # remainder tile present?

    def kernel(x_ref, w1a_ref, w1b_ref, w2_ref, o_ref, acc_sum, acc_max):
        j = pl.program_id(1)

        @pl.when(j == 0)
        def _init():
            acc_sum[...] = jnp.zeros_like(acc_sum)
            acc_max[...] = jnp.full_like(acc_max, -jnp.inf)

        if needs_mask:
            # global HW position of each lane in a 128-wide chunk
            lane_idx = jax.lax.broadcasted_iota(jnp.int32, (C, LANE), 1)
            tile_base = j * tile_hw

        # Steady state: pure VPU per-lane running sum / max (no XLU work).
        s = acc_sum[...]
        m = acc_max[...]
        for k in range(num_chunks):
            xk = x_ref[0, :, k * LANE:(k + 1) * LANE].astype(jnp.float32)  # (C, 128)
            if needs_mask:
                valid = (tile_base + k * LANE + lane_idx) < HW
                s = s + jnp.where(valid, xk, 0.0)
                m = jnp.maximum(m, jnp.where(valid, xk, -jnp.inf))
            else:
                s = s + xk
                m = jnp.maximum(m, xk)
        acc_sum[...] = s
        acc_max[...] = m

        @pl.when(j == pl.num_programs(1) - 1)
        def _finalize():
            # Single cross-lane reduce at the very end.
            avg = jnp.sum(acc_sum[...], axis=-1, keepdims=True) * (1.0 / HW)  # (C, 1)
            mx = jnp.max(acc_max[...], axis=-1, keepdims=True)                # (C, 1)
            # conv1 on concat([avg, mx]) == W1[:, :C] @ avg + W1[:, C:] @ mx
            h = (jnp.dot(w1a_ref[...], avg, preferred_element_type=jnp.float32)
                 + jnp.dot(w1b_ref[...], mx, preferred_element_type=jnp.float32))
            h = jax.nn.sigmoid(h)                                             # (Cmid, 1)
            out = jnp.dot(w2_ref[...], h, preferred_element_type=jnp.float32)  # (C, 1)
            o_ref[...] = jax.nn.sigmoid(out).reshape(1, C, 1).astype(o_ref.dtype)

    cost = pl.CostEstimate(
        flops=int(2 * B * C * HW + 6 * B * C * Cmid),
        transcendentals=int(B * (Cmid + C)),
        bytes_accessed=int(B * C * HW * itemsize
                           + 3 * C * Cmid * jnp.dtype(conv1_w.dtype).itemsize
                           + B * C * itemsize),
    )

    grid_spec = pltpu.PrefetchScalarGridSpec(
        num_scalar_prefetch=0,
        grid=(B, grid_hw),
        in_specs=[
            pl.BlockSpec((1, C, tile_hw), lambda b, j: (b, 0, j)),
            pl.BlockSpec((Cmid, C), lambda b, j: (0, 0)),
            pl.BlockSpec((Cmid, C), lambda b, j: (0, 0)),
            pl.BlockSpec((C, Cmid), lambda b, j: (0, 0)),
        ],
        out_specs=pl.BlockSpec((1, C, 1), lambda b, j: (b, 0, 0)),
        scratch_shapes=[
            pltpu.VMEM((C, LANE), jnp.float32),   # running sum
            pltpu.VMEM((C, LANE), jnp.float32),   # running max
        ],
    )

    out = pl.pallas_call(
        kernel,
        out_shape=jax.ShapeDtypeStruct((B, C, 1), x_nchw.dtype),
        grid_spec=grid_spec,
        compiler_params=pltpu.CompilerParams(
            dimension_semantics=("parallel", "arbitrary"),
            vmem_limit_bytes=32 * 1024 * 1024,
        ),
        cost_estimate=cost,
    )(x_flat, w1a, w1b, w2)

    return out.reshape(B, C, 1, 1)


def channel_attention_ref(x_nchw, conv1_w, conv2_w):
    """Pure-JAX reference matching the PyTorch module."""
    B, C, H, W = x_nchw.shape
    avg = jnp.mean(x_nchw, axis=(2, 3))                # (B, C)
    mx = jnp.max(x_nchw, axis=(2, 3))                  # (B, C)
    cat = jnp.concatenate([avg, mx], axis=1)           # (B, 2C)
    w1 = conv1_w.reshape(conv1_w.shape[0], -1)         # (Cmid, 2C)
    w2 = conv2_w.reshape(conv2_w.shape[0], -1)         # (C, Cmid)
    h = jax.nn.sigmoid(cat @ w1.T)
    out = jax.nn.sigmoid(h @ w2.T)
    return out.reshape(B, C, 1, 1)


if __name__ == "__main__":
    key = jax.random.PRNGKey(0)

    # ---- main check: B=2, C=4, H=W=16 (HW divides the tile, no masking) ----
    B, C, H, W = 2, 4, 16, 16
    ratio = 1
    Cmid = C // ratio
    kx, k1, k2, kx2, k3, k4 = jax.random.split(key, 6)

    x = jax.random.normal(kx, (B, C, H, W), dtype=jnp.float32)
    conv1_w = jax.random.normal(k1, (Cmid, 2 * C, 1, 1), dtype=jnp.float32) * 0.1
    conv2_w = jax.random.normal(k2, (C, Cmid, 1, 1), dtype=jnp.float32) * 0.1

    out = channel_attention(x, conv1_w, conv2_w)
    out = jax.block_until_ready(out)
    ref = channel_attention_ref(x, conv1_w, conv2_w)
    assert out.shape == (B, C, 1, 1)
    assert jnp.allclose(out, ref, atol=1e-5, rtol=1e-5)

    # ---- remainder-tile check: HW=144 with tile_hw=128 (masked last tile) --
    B2, C2, H2, W2 = 2, 8, 12, 12
    Cmid2 = C2
    x2 = jax.random.normal(kx2, (B2, C2, H2, W2), dtype=jnp.float32)
    c1w2 = jax.random.normal(k3, (Cmid2, 2 * C2, 1, 1), dtype=jnp.float32) * 0.1
    c2w2 = jax.random.normal(k4, (C2, Cmid2, 1, 1), dtype=jnp.float32) * 0.1

    out2 = channel_attention(x2, c1w2, c2w2, max_tile_hw=128)
    out2 = jax.block_until_ready(out2)
    ref2 = channel_attention_ref(x2, c1w2, c2w2)
    assert jnp.allclose(out2, ref2, atol=1e-5, rtol=1e-5)

    print("KERNEL_OK")
</pallas_src>

<mosaic_0001>
module attributes {stable_mosaic.version = 11 : i64} {
  func.func @kernel(%arg0: i32, %arg1: i32, %arg2: memref<1x4x256xf32, #tpu.memory_space<vmem>>, %arg3: memref<4x4xf32, #tpu.memory_space<vmem>>, %arg4: memref<4x4xf32, #tpu.memory_space<vmem>>, %arg5: memref<4x4xf32, #tpu.memory_space<vmem>>, %arg6: memref<1x4x1xf32, #tpu.memory_space<vmem>>, %arg7: memref<4x128xf32, #tpu.memory_space<vmem>>, %arg8: memref<4x128xf32, #tpu.memory_space<vmem>>) attributes {dimension_semantics = [#tpu.dimension_semantics<parallel>, #tpu.dimension_semantics<arbitrary>], iteration_bounds = array<i64: 2, 1>, scalar_prefetch = 0 : i64, scratch_operands = 2 : i64, tpu.core_type = #tpu.core_type<tc>, window_params = [{transform_indices = @transform_0, window_bounds = array<i64: 1, 4, 256>}, {pipeline_mode = #tpu.pipeline_mode<synchronous>, transform_indices = @transform_1, window_bounds = array<i64: 4, 4>}, {pipeline_mode = #tpu.pipeline_mode<synchronous>, transform_indices = @transform_2, window_bounds = array<i64: 4, 4>}, {pipeline_mode = #tpu.pipeline_mode<synchronous>, transform_indices = @transform_3, window_bounds = array<i64: 4, 4>}, {transform_indices = @transform_4, window_bounds = array<i64: 1, 4, 1>}]} {
    %c0_i32 = arith.constant 0 : i32
    %0 = arith.cmpi eq, %arg1, %c0_i32 : i32
    %1 = arith.extui %0 : i1 to i32
    %c0_i32_0 = arith.constant 0 : i32
    %2 = arith.cmpi ne, %1, %c0_i32_0 : i32
    scf.if %2 {
      %cst = arith.constant 0.000000e+00 : f32
      %18 = vector.broadcast %cst : f32 to vector<4x128xf32>
      %c0_15 = arith.constant 0 : index
      %c0_16 = arith.constant 0 : index
      %19 = vector.load %arg7[%c0_15, %c0_16] : memref<4x128xf32, #tpu.memory_space<vmem>>, vector<4x128xf32>
      tpu.vector_store %arg7[%c0_15, %c0_16], %18 {strides = array<i32>} : memref<4x128xf32, #tpu.memory_space<vmem>>, vector<4x128xf32>,
      %cst_17 = arith.constant 0xFF800000 : f32
      %20 = vector.broadcast %cst_17 : f32 to vector<4x128xf32>
      %c0_18 = arith.constant 0 : index
      %c0_19 = arith.constant 0 : index
      %21 = vector.load %arg8[%c0_18, %c0_19] : memref<4x128xf32, #tpu.memory_space<vmem>>, vector<4x128xf32>
      tpu.vector_store %arg8[%c0_18, %c0_19], %20 {strides = array<i32>} : memref<4x128xf32, #tpu.memory_space<vmem>>, vector<4x128xf32>,
    } else {
    }
    %c0 = arith.constant 0 : index
    %c0_1 = arith.constant 0 : index
    %3 = vector.load %arg7[%c0, %c0_1] : memref<4x128xf32, #tpu.memory_space<vmem>>, vector<4x128xf32>
    %c0_2 = arith.constant 0 : index
    %c0_3 = arith.constant 0 : index
    %4 = vector.load %arg8[%c0_2, %c0_3] : memref<4x128xf32, #tpu.memory_space<vmem>>, vector<4x128xf32>
    %c0_4 = arith.constant 0 : index
    %c0_5 = arith.constant 0 : index
    %c0_6 = arith.constant 0 : index
    %5 = vector.load %arg2[%c0_4, %c0_5, %c0_6] : memref<1x4x256xf32, #tpu.memory_space<vmem>>, vector<1x4x128xf32>
    %6 = vector.shape_cast %5 : vector<1x4x128xf32> to vector<4x128xf32>
    %7 = arith.addf %3, %6 : vector<4x128xf32>
    %8 = arith.maximumf %4, %6 : vector<4x128xf32>
    %c0_7 = arith.constant 0 : index
    %c0_8 = arith.constant 0 : index
    %c128 = arith.constant 128 : index
    %9 = vector.load %arg2[%c0_7, %c0_8, %c128] : memref<1x4x256xf32, #tpu.memory_space<vmem>>, vector<1x4x128xf32>
    %10 = vector.shape_cast %9 : vector<1x4x128xf32> to vector<4x128xf32>
    %11 = arith.addf %7, %10 : vector<4x128xf32>
    %12 = arith.maximumf %8, %10 : vector<4x128xf32>
    %c0_9 = arith.constant 0 : index
    %c0_10 = arith.constant 0 : index
    %13 = vector.load %arg7[%c0_9, %c0_10] : memref<4x128xf32, #tpu.memory_space<vmem>>, vector<4x128xf32>
    tpu.vector_store %arg7[%c0_9, %c0_10], %11 {strides = array<i32>} : memref<4x128xf32, #tpu.memory_space<vmem>>, vector<4x128xf32>,
    %c0_11 = arith.constant 0 : index
    %c0_12 = arith.constant 0 : index
    %14 = vector.load %arg8[%c0_11, %c0_12] : memref<4x128xf32, #tpu.memory_space<vmem>>, vector<4x128xf32>
    tpu.vector_store %arg8[%c0_11, %c0_12], %12 {strides = array<i32>} : memref<4x128xf32, #tpu.memory_space<vmem>>, vector<4x128xf32>,
    %c0_i32_13 = arith.constant 0 : i32
    %15 = arith.cmpi eq, %arg1, %c0_i32_13 : i32
    %16 = arith.extui %15 : i1 to i32
    %c0_i32_14 = arith.constant 0 : i32
    %17 = arith.cmpi ne, %16, %c0_i32_14 : i32
    scf.if %17 {
      %c0_15 = arith.constant 0 : index
      %c0_16 = arith.constant 0 : index
      %18 = vector.load %arg7[%c0_15, %c0_16] : memref<4x128xf32, #tpu.memory_space<vmem>>, vector<4x128xf32>
      %cst = arith.constant dense<0.000000e+00> : vector<4xf32>
      %19 = vector.multi_reduction <add>, %18, %cst [1] : vector<4x128xf32> to vector<4xf32>
      %20 = vector.shape_cast %19 : vector<4xf32> to vector<4x1xf32>
      %cst_17 = arith.constant 3.906250e-03 : f32
      %21 = vector.broadcast %cst_17 : f32 to vector<4x1xf32>
      %22 = arith.mulf %20, %21 : vector<4x1xf32>
      %c0_18 = arith.constant 0 : index
      %c0_19 = arith.constant 0 : index
      %23 = vector.load %arg8[%c0_18, %c0_19] : memref<4x128xf32, #tpu.memory_space<vmem>>, vector<4x128xf32>
      %cst_20 = arith.constant dense<0xFF800000> : vector<4xf32>
      %24 = vector.multi_reduction <maximumf>, %23, %cst_20 [1] : vector<4x128xf32> to vector<4xf32>
      %25 = vector.shape_cast %24 : vector<4xf32> to vector<4x1xf32>
      %c0_21 = arith.constant 0 : index
      %c0_22 = arith.constant 0 : index
      %26 = vector.load %arg3[%c0_21, %c0_22] : memref<4x4xf32, #tpu.memory_space<vmem>>, vector<4x4xf32>
      %cst_23 = arith.constant dense<0.000000e+00> : vector<4x1xf32>
      %27 = tpu.matmul %26, %22, %cst_23 {dimension_numbers = #tpu.dot_dimension_numbers<[1], [0], [0], [1], [0, 0, 1, 1], [], []>} : vector<4x4xf32>, vector<4x1xf32>, vector<4x1xf32> -> vector<4x1xf32>
      %c0_24 = arith.constant 0 : index
      %c0_25 = arith.constant 0 : index
      %28 = vector.load %arg4[%c0_24, %c0_25] : memref<4x4xf32, #tpu.memory_space<vmem>>, vector<4x4xf32>
      %cst_26 = arith.constant dense<0.000000e+00> : vector<4x1xf32>
      %29 = tpu.matmul %28, %25, %cst_26 {dimension_numbers = #tpu.dot_dimension_numbers<[1], [0], [0], [1], [0, 0, 1, 1], [], []>} : vector<4x4xf32>, vector<4x1xf32>, vector<4x1xf32> -> vector<4x1xf32>
      %30 = arith.addf %27, %29 : vector<4x1xf32>
      %31 = arith.negf %30 : vector<4x1xf32>
      %32 = math.exp %31 : vector<4x1xf32>
      %cst_27 = arith.constant 1.000000e+00 : f32
      %33 = vector.broadcast %cst_27 : f32 to vector<4x1xf32>
      %34 = arith.addf %33, %32 : vector<4x1xf32>
      %35 = arith.divf %33, %34 : vector<4x1xf32>
      %c0_28 = arith.constant 0 : index
      %c0_29 = arith.constant 0 : index
      %36 = vector.load %arg5[%c0_28, %c0_29] : memref<4x4xf32, #tpu.memory_space<vmem>>, vector<4x4xf32>
      %cst_30 = arith.constant dense<0.000000e+00> : vector<4x1xf32>
      %37 = tpu.matmul %36, %35, %cst_30 {dimension_numbers = #tpu.dot_dimension_numbers<[1], [0], [0], [1], [0, 0, 1, 1], [], []>} : vector<4x4xf32>, vector<4x1xf32>, vector<4x1xf32> -> vector<4x1xf32>
      %38 = arith.negf %37 : vector<4x1xf32>
      %39 = math.exp %38 : vector<4x1xf32>
      %cst_31 = arith.constant 1.000000e+00 : f32
      %40 = vector.broadcast %cst_31 : f32 to vector<4x1xf32>
      %41 = arith.addf %40, %39 : vector<4x1xf32>
      %42 = arith.divf %40, %41 : vector<4x1xf32>
      %43 = vector.shape_cast %42 : vector<4x1xf32> to vector<1x4x1xf32>
      %c0_32 = arith.constant 0 : index
      %c0_33 = arith.constant 0 : index
      %c0_34 = arith.constant 0 : index
      %44 = vector.load %arg6[%c0_32, %c0_33, %c0_34] : memref<1x4x1xf32, #tpu.memory_space<vmem>>, vector<1x4x1xf32>
      tpu.vector_store %arg6[%c0_32, %c0_33, %c0_34], %43 {strides = array<i32>} : memref<1x4x1xf32, #tpu.memory_space<vmem>>, vector<1x4x1xf32>,
    } else {
    }
    return
  }
  func.func @transform_0(%arg0: i32, %arg1: i32) -> (i32, i32, i32) {
    %c0_i32 = arith.constant 0 : i32
    %c0_i32_0 = arith.constant 0 : i32
    return %arg0, %c0_i32, %arg1 : i32, i32, i32
  }
  func.func @transform_1(%arg0: i32, %arg1: i32) -> (i32, i32) {
    %c0_i32 = arith.constant 0 : i32
    %c0_i32_0 = arith.constant 0 : i32
    %c0_i32_1 = arith.constant 0 : i32
    return %c0_i32, %c0_i32_0 : i32, i32
  }
  func.func @transform_2(%arg0: i32, %arg1: i32) -> (i32, i32) {
    %c0_i32 = arith.constant 0 : i32
    %c0_i32_0 = arith.constant 0 : i32
    %c0_i32_1 = arith.constant 0 : i32
    return %c0_i32, %c0_i32_0 : i32, i32
  }
  func.func @transform_3(%arg0: i32, %arg1: i32) -> (i32, i32) {
    %c0_i32 = arith.constant 0 : i32
    %c0_i32_0 = arith.constant 0 : i32
    %c0_i32_1 = arith.constant 0 : i32
    return %c0_i32, %c0_i32_0 : i32, i32
  }
  func.func @transform_4(%arg0: i32, %arg1: i32) -> (i32, i32, i32) {
    %c0_i32 = arith.constant 0 : i32
    %c0_i32_0 = arith.constant 0 : i32
    %c0_i32_1 = arith.constant 0 : i32
    return %arg0, %c0_i32, %c0_i32_0 : i32, i32, i32
  }
}

</mosaic_0001>

<llo_original>
// kernel: tpu_custom_call.1
$region0: #{tpu_custom_call.1}
  #allocation0 [shape = 'u32[]', space=smem, size = 0x4, offset = 0x4, fixed_abs, tag = 'smem constant byte address 0x4 - core index']
  #allocation1 [shape = 'u32[144,128]{1,0:T(1,128)}', space=vmem, size = 0x12000, scoped, tag = 'internal scratch']
  #allocation2 [shape = 'f32[4,128]{1,0:T(4,128)}', space=vmem, size = 0x800, scoped, tag = 'scratch operand']
  #allocation3 [shape = 'f32[4,128]{1,0:T(4,128)}', space=vmem, size = 0x800, scoped, tag = 'scratch operand']
  %s0 = inlined_call_operand.hbm [shape: f32[2,4,256], index: 0, kind: input, shape index: {}]
  %s1 = inlined_call_operand.hbm [shape: f32[4,4], index: 1, kind: input, shape index: {}]
  %s2 = inlined_call_operand.hbm [shape: f32[4,4], index: 2, kind: input, shape index: {}]
  %s3 = inlined_call_operand.vmem [shape: f32[4,4], index: 3, kind: input, shape index: {}]
  %s4 = inlined_call_operand.vmem [shape: f32[2,4,1], index: 4, kind: output, shape index: {}]
  %s5 = sld [smem:[#allocation0]]
  $region69: #{tpu_custom_call.1} parent=0
    _
  %s7 = ssub.s32 1, %s5
  %s8 = scalar_select 0, %s7, %s5
  $region1: #{tpu_custom_call.1} parent=0
    #allocation4 [shape = 'u8[8192]{0}', space=vmem, size = 0x2000, scoped, tag = 'input window, operand 0']
    #allocation5 [shape = 's32[2]{0}', space=sflag, size = 0x8, scoped, tag = 'scoped memory for tpu_custom_call.1']
    #allocation6 [shape = 'u8[2048]{0}', space=vmem, size = 0x800, scoped, tag = 'input window, operand 1, single buffered']
    #allocation7 [shape = 's32[1]{0}', space=sflag, size = 0x4, scoped, tag = 'scoped memory for tpu_custom_call.1']
    #allocation8 [shape = 'u8[2048]{0}', space=vmem, size = 0x800, scoped, tag = 'input window, operand 2, single buffered']
    %9 = vsyncpa [#allocation5], 0
    %s10 = scalar_lea.sflag [#allocation5], 1
    %11 = vsyncpa %s10, 0
    %12 = vsyncpa [#allocation7], 0
    loop: start=0, step=1, limit=4
    $region2: #{tpu_custom_call.1} parent=1 // loop_pre_header
      _
    $region3: #{tpu_custom_call.1} parent=1 // loop_header
      %s14 = sphi 0, %s18
      %p15 = scmp.ge.s32.totalorder %s14, 4
      %s21 = sphi 0, %s33
      %s22 = sphi 0, %s29
      %s23 = sphi 0, %s21
      %s24 = sphi 0, %s22
      %s25 = sphi 0, %s23
      %s26 = sphi 0, %s24
      %s38 = sphi 0, %s40
      %s41 = sphi 0, %s38
      %s42 = sphi 0, %s41
      %s58 = sphi 0, %s42
      %s62 = sphi 0, %s62
      %s64 = sphi 0, %s62
      %s65 = sphi 0, %s64
      %s79 = sphi 0, %s65
      %s83 = sphi 0, %s83
      %s85 = sphi 0, %s83
      %s86 = sphi 0, %s85
      %s100 = sphi 0, %s86
      %s104 = sphi 0, %s104
      %s106 = sphi 0, %s104
      %s107 = sphi 0, %s106
      %s121 = sphi 0, %s107
      %s127 = sphi 0, %s129
      %s130 = sphi 0, %s127
      %s131 = sphi 0, %s130
      %s147 = sphi 0, %s131
    $region4: #{tpu_custom_call.1} parent=1 // loop_header_branch
      %17 = sbr.rel (%p15) target = $region8
    $region5: #{tpu_custom_call.1} parent=1 // loop_body
      %s19 = ssub.s32 %s14, 1
      %s20 = ssub.s32 %s14, 2
      %s27 = sadd.s32 1, %s22
      %p28 = scmp.ge.s32.totalorder %s27, 1
      %s29 = scalar_select %p28, 0, %s27
      %s30 = sadd.s32 1, %s21
      %s31 = scalar_select %p28, %s30, %s21
      %p32 = scmp.ge.s32.totalorder %s31, 2
      %s33 = scalar_select %p32, 0, %s31
      %s34 = ssub.s32 %s21, %s33
      %s35 = ssub.s32 %s22, %s29
      %s36 = sor.u32 %s34, %s35
      %p37 = scmp.eq.s32.totalorder %s36, 0
      %s39 = sadd.s32 %s38, 1
      %s40 = scalar_select %p37, %s38, %s39
      %p43 = pneg %p37
      %p44 = scmp.eq.s32.totalorder %s14, 1
      %p45 = por %p43, %p44
      %p46 = scmp.ne.s32.totalorder %s38, %s41
      %p47 = scmp.eq.s32.totalorder %s14, 0
      %p48 = por %p46, %p47
      %p49 = scmp.ne.s32.totalorder %s38, %s41
      %p50 = scmp.eq.s32.totalorder %s19, 1
      %p51 = por %p49, %p50
      %p52 = scmp.ne.s32.totalorder %s41, %s42
      %p53 = scmp.eq.s32.totalorder %s19, 0
      %p54 = por %p52, %p53
      %p55 = scmp.ne.s32.totalorder %s41, %s42
      %p56 = scmp.eq.s32.totalorder %s20, 1
      %p57 = por %p55, %p56
      %p59 = scmp.ne.s32.totalorder %s42, %s58
      %p60 = scmp.eq.s32.totalorder %s20, 0
      %p61 = por %p59, %p60
      %s63 = sadd.s32 %s62, 1
      %p66 = scmp.eq.s32.totalorder %s14, 1
      %p67 = scmp.ne.s32.totalorder %s62, %s64
      %p68 = scmp.eq.s32.totalorder %s14, 0
      %p69 = por %p67, %p68
      %p70 = scmp.ne.s32.totalorder %s62, %s64
      %p71 = scmp.eq.s32.totalorder %s19, 1
      %p72 = por %p70, %p71
      %p73 = scmp.ne.s32.totalorder %s64, %s65
      %p74 = scmp.eq.s32.totalorder %s19, 0
      %p75 = por %p73, %p74
      %p76 = scmp.ne.s32.totalorder %s64, %s65
      %p77 = scmp.eq.s32.totalorder %s20, 1
      %p78 = por %p76, %p77
      %p80 = scmp.ne.s32.totalorder %s65, %s79
      %p81 = scmp.eq.s32.totalorder %s20, 0
      %p82 = por %p80, %p81
      %s84 = sadd.s32 %s83, 1
      %p87 = scmp.eq.s32.totalorder %s14, 1
      %p88 = scmp.ne.s32.totalorder %s83, %s85
      %p89 = scmp.eq.s32.totalorder %s14, 0
      %p90 = por %p88, %p89
      %p91 = scmp.ne.s32.totalorder %s83, %s85
      %p92 = scmp.eq.s32.totalorder %s19, 1
      %p93 = por %p91, %p92
      %p94 = scmp.ne.s32.totalorder %s85, %s86
      %p95 = scmp.eq.s32.totalorder %s19, 0
      %p96 = por %p94, %p95
      %p97 = scmp.ne.s32.totalorder %s85, %s86
      %p98 = scmp.eq.s32.totalorder %s20, 1
      %p99 = por %p97, %p98
      %p101 = scmp.ne.s32.totalorder %s86, %s100
      %p102 = scmp.eq.s32.totalorder %s20, 0
      %p103 = por %p101, %p102
      %s105 = sadd.s32 %s104, 1
      %p108 = scmp.eq.s32.totalorder %s14, 1
      %p109 = scmp.ne.s32.totalorder %s104, %s106
      %p110 = scmp.eq.s32.totalorder %s14, 0
      %p111 = por %p109, %p110
      %p112 = scmp.ne.s32.totalorder %s104, %s106
      %p113 = scmp.eq.s32.totalorder %s19, 1
      %p114 = por %p112, %p113
      %p115 = scmp.ne.s32.totalorder %s106, %s107
      %p116 = scmp.eq.s32.totalorder %s19, 0
      %p117 = por %p115, %p116
      %p118 = scmp.ne.s32.totalorder %s106, %s107
      %p119 = scmp.eq.s32.totalorder %s20, 1
      %p120 = por %p118, %p119
      %p122 = scmp.ne.s32.totalorder %s107, %s121
      %p123 = scmp.eq.s32.totalorder %s20, 0
      %p124 = por %p122, %p123
      %s125 = ssub.s32 %s21, %s33
      %p126 = scmp.eq.s32.totalorder %s125, 0
      %s128 = sadd.s32 %s127, 1
      %s129 = scalar_select %p126, %s127, %s128
      %p132 = pneg %p126
      %p133 = scmp.eq.s32.totalorder %s14, 1
      %p134 = por %p132, %p133
      %p135 = scmp.ne.s32.totalorder %s127, %s130
      %p136 = scmp.eq.s32.totalorder %s14, 0
      %p137 = por %p135, %p136
      %p138 = scmp.ne.s32.totalorder %s127, %s130
      %p139 = scmp.eq.s32.totalorder %s19, 1
      %p140 = por %p138, %p139
      %p141 = scmp.ne.s32.totalorder %s130, %s131
      %p142 = scmp.eq.s32.totalorder %s19, 0
      %p143 = por %p141, %p142
      %p144 = scmp.ne.s32.totalorder %s130, %s131
      %p145 = scmp.eq.s32.totalorder %s20, 1
      %p146 = por %p144, %p145
      %p148 = scmp.ne.s32.totalorder %s131, %s147
      %p149 = scmp.eq.s32.totalorder %s20, 0
      %p150 = por %p148, %p149
      %p151 = scmp.le.s32.totalorder 1, %s14
      %p152 = scmp.lt.s32.totalorder %s14, 3
      %p153 = pnand %p151, %p152
      %p154 = pneg %p153
      // Predicated region
      $region9: #{tpu_custom_call.1} parent=5 // pred_check
        _
      $region10: #{tpu_custom_call.1} parent=5 // pred_check_branch
        %156 = sbr.rel (%p153) target = $region12
      $region11: #{tpu_custom_call.1} parent=5 // pred_region
        %s157 = ssub.s32 %s14, 1
        // Predicated region
        $region13: #{tpu_custom_call.1} parent=11 // pred_check
          %p158 = pneg %p75
        $region14: #{tpu_custom_call.1} parent=11 // pred_check_branch
          %160 = sbr.rel (%p158) target = $region16
        $region15: #{tpu_custom_call.1} parent=11 // pred_region
          %s162 = ssub.s32 64, 64
          %163 = vsyncadd [#allocation7], %s162
          %s165 = sshll.u32 [#allocation6], 4
          %s166 = int_to_ptr.vmem [resolvable:$true] %s165
          %168 = dma.hbm_to_vmem [thread:$0]  %s1, 64, %s166, [#allocation7]
        $region16: #{tpu_custom_call.1} parent=11 // pred_fallthru
          _
        // Predicated region
        $region17: #{tpu_custom_call.1} parent=11 // pred_check
          %p169 = pneg %p96
        $region18: #{tpu_custom_call.1} parent=11 // pred_check_branch
          %171 = sbr.rel (%p169) target = $region20
        $region19: #{tpu_custom_call.1} parent=11 // pred_region
          %s173 = ssub.s32 64, 64
          %174 = vsyncadd [#allocation7], %s173
          %s176 = sshll.u32 [#allocation8], 4
          %s177 = int_to_ptr.vmem [resolvable:$true] %s176
          %179 = dma.hbm_to_vmem [thread:$0]  %s2, 64, %s177, [#allocation7]
        $region20: #{tpu_custom_call.1} parent=11 // pred_fallthru
          _
        // Predicated region
        $region21: #{tpu_custom_call.1} parent=11 // pred_check
          %p180 = pneg %p117
        $region22: #{tpu_custom_call.1} parent=11 // pred_check_branch
          %182 = sbr.rel (%p180) target = $region24
        $region23: #{tpu_custom_call.1} parent=11 // pred_region
          _
        $region24: #{tpu_custom_call.1} parent=11 // pred_fallthru
          _
      $region12: #{tpu_custom_call.1} parent=5 // pred_fallthru
        _
      %p183 = scmp.lt.s32.totalorder %s14, 2
      // Predicated region
      $region25: #{tpu_custom_call.1} parent=5 // pred_check
        %p184 = pneg %p183
      $region26: #{tpu_custom_call.1} parent=5 // pred_check_branch
        %186 = sbr.rel (%p184) target = $region28
      $region27: #{tpu_custom_call.1} parent=5 // pred_region
        // Predicated region
        $region29: #{tpu_custom_call.1} parent=27 // pred_check
          %p187 = pneg %p48
        $region30: #{tpu_custom_call.1} parent=27 // pred_check_branch
          %189 = sbr.rel (%p187) target = $region32
        $region31: #{tpu_custom_call.1} parent=27 // pred_region
          %s190 = sand.u32 %s38, 1
          %s191 = scalar_lea.sflag [#allocation5], %s190
          %s192 = sand.u32 %s38, 1
          %s193 = smul.addr %s192, 8
          %s194 = scalar_lea.vmem [#allocation4], %s193
          %s195 = smul.u32 2, %s22
          %s197 = ssub.s32 128, 128
          %198 = vsyncadd %s191, %s197
          %s199 = smul.addr %s21, 2
          %s200 = sadd.s32 %s195, %s199
          %s201 = smul.addr %s200, 64
          %s202 = scalar_lea.hbm %s0, %s201
          %s204 = sshll.u32 %s194, 4
          %s205 = int_to_ptr.vmem [resolvable:$true] %s204
          %207 = dma.hbm_to_vmem [thread:$0]  %s202, 128, %s205, %s191
        $region32: #{tpu_custom_call.1} parent=27 // pred_fallthru
          _
      $region28: #{tpu_custom_call.1} parent=5 // pred_fallthru
        _
      %p208 = scmp.le.s32.totalorder 1, %s14
      %p209 = scmp.lt.s32.totalorder %s14, 3
      %p210 = pnand %p208, %p209
      %p211 = pneg %p210
      // Predicated region
      $region33: #{tpu_custom_call.1} parent=5 // pred_check
        _
      $region34: #{tpu_custom_call.1} parent=5 // pred_check_branch
        %213 = sbr.rel (%p210) target = $region36
      $region35: #{tpu_custom_call.1} parent=5 // pred_region
        %s214 = ssub.s32 %s14, 1
        %s215 = sand.u32 %s41, 1
        %s216 = scalar_lea.sflag [#allocation5], %s215
        %s217 = sand.u32 %s41, 1
        %s218 = smul.addr %s217, 8
        %s219 = scalar_lea.vmem [#allocation4], %s218
        // Predicated region
        $region37: #{tpu_custom_call.1} parent=35 // pred_check
          %p220 = pneg %p54
        $region38: #{tpu_custom_call.1} parent=35 // pred_check_branch
          %222 = sbr.rel (%p220) target = $region40
        $region39: #{tpu_custom_call.1} parent=35 // pred_region
          %223 = dma.done %s216, 128
        $region40: #{tpu_custom_call.1} parent=35 // pred_fallthru
          _
        // Predicated region
        $region41: #{tpu_custom_call.1} parent=35 // pred_check
          %p224 = pneg %p75
        $region42: #{tpu_custom_call.1} parent=35 // pred_check_branch
          %226 = sbr.rel (%p224) target = $region44
        $region43: #{tpu_custom_call.1} parent=35 // pred_region
          %227 = dma.done [#allocation7], 64
        $region44: #{tpu_custom_call.1} parent=35 // pred_fallthru
          _
        // Predicated region
        $region45: #{tpu_custom_call.1} parent=35 // pred_check
          %p228 = pneg %p96
        $region46: #{tpu_custom_call.1} parent=35 // pred_check_branch
          %230 = sbr.rel (%p228) target = $region48
        $region47: #{tpu_custom_call.1} parent=35 // pred_region
          %231 = dma.done [#allocation7], 64
        $region48: #{tpu_custom_call.1} parent=35 // pred_fallthru
          _
        %s232 = sand.u32 %s41, 1
        %s233 = scalar_lea.sflag [#allocation5], %s232
        %s234 = sand.u32 %s41, 1
        %s235 = smul.addr %s234, 8
        %s236 = scalar_lea.vmem [#allocation4], %s235
        %p237 = pneg %p54
        %p238 = pneg %p51
        %p239 = pneg %p75
        %p240 = pneg %p72
        %p241 = pneg %p96
        %p242 = pneg %p93
        %p243 = pneg %p117
        %p244 = pneg %p114
        %p245 = pneg %p143
        %p246 = pneg %p140
        %p247 = scmp.lt.s32.totalorder %s23, 1
        %s248 = scalar_select %p247, %s23, 1
        %s249 = smul.addr %s248, 4
        %s250 = scalar_lea.vmem %s4, %s249
        %s251 = smul.u32 2, %s24
        %p252 = scmp.lt.s32.totalorder %s23, 1
        %s253 = scalar_select %p252, %s23, 1
        %s254 = smul.addr %s253, 4
        %s255 = scalar_lea.vmem %s4, %s254
        %p256 = scmp.eq.s32.totalorder %s24, 0
        // Predicated region
        $region49: #{tpu_custom_call.1} parent=35 // pred_check
          %p257 = pneg %p256
        $region50: #{tpu_custom_call.1} parent=35 // pred_check_branch
          %259 = sbr.rel (%p257) target = $region52
        $region51: #{tpu_custom_call.1} parent=35 // pred_region
          %260 = vst [vmem:[#allocation2] sm:$0xf] 0.0
          %261 = vst [vmem:[#allocation3] sm:$0xf] -inf
        $region52: #{tpu_custom_call.1} parent=35 // pred_fallthru
          _
        %v262 = vld [vmem:[#allocation2] sm:$0xf]
        %v263 = vld [vmem:[#allocation3] sm:$0xf]
        %v264 = vld [vmem:[%s219] sm:$0xf]
        %v265 = vadd.f32 %v262, %v264
        %v266 = vmax.f32 %v263, %v264
        %v267 = vld [vmem:[%s219 + $0x4] sm:$0xf]
        %v268 = vadd.f32 %v265, %v267
        %v269 = vmax.f32 %v266, %v267
        %270 = vst [vmem:[#allocation2] sm:$0xf] %v268
        %271 = vst [vmem:[#allocation3] sm:$0xf] %v269
        // Predicated region
        $region53: #{tpu_custom_call.1} parent=35 // pred_check
          %p272 = pneg %p256
        $region54: #{tpu_custom_call.1} parent=35 // pred_check_branch
          %274 = sbr.rel (%p272) target = $region56
        $region55: #{tpu_custom_call.1} parent=35 // pred_region
          %v275 = vld [vmem:[#allocation2] sm:$0xf]
          %vm276 = vcmask 1043456
          %v277 = vsel %vm276, %v275, 0.0
          %278 = vadd.xlane.f32.xlu0 %v277
          %v279 = vpop.xlane.xlu0 %278
          %v280 = vmul.f32 %v279, 0.00390625
          %v281 = vld [vmem:[#allocation3] sm:$0xf]
          %v282 = vsel %vm276, %v281, -inf
          %283 = vmax.xlane.f32.xlu0 %v282
          %v284 = vpop.xlane.xlu0 %283
          %v285 = vld [vmem:[#allocation6] sm:$0xf]
          %v286 = vld [vmem:[#allocation8] sm:$0xf]
          %vm287 = vcmask 31744
          %v289 = vsel %vm287, %v286, 0
          %v292 = vsel %vm276, %v284, 0
          %294 = vmatprep.subr.mxu0 0.0
          %295 = vmatpush1.msra.mxu0 0.0
          %296 = vmatprep.subr.mxu0 0.0
          %297 = vmatpush1.msra.mxu0 0.0
          %298 = vmatprep.subr.mxu0 0.0
          %299 = vmatpush1.msra.mxu0 0.0
          %300 = vmatprep.subr.mxu0 0.0
          %301 = vmatpush1.msra.mxu0 0.0
          %302 = vmatprep.subr.mxu0 0.0
          %303 = vmatpush1.msra.mxu0 0.0
          %304 = vmatprep.subr.mxu0 0.0
          %305 = vmatpush1.msra.mxu0 0.0
          %306 = vmatprep.subr.mxu0 0.0
          %307 = vmatpush1.msra.mxu0 0.0
          %308 = vmatprep.subr.mxu0 0.0
          %309 = vmatpush1.msra.mxu0 0.0
          %310 = vmatprep.subr.mxu0 0.0
          %311 = vmatpush1.msra.mxu0 0.0
          %312 = vmatprep.subr.mxu0 0.0
          %313 = vmatpush1.msra.mxu0 0.0
          %314 = vmatprep.subr.mxu0 0.0
          %315 = vmatpush1.msra.mxu0 0.0
          %316 = vmatprep.subr.mxu0 0.0
          %317 = vmatpush1.msra.mxu0 0.0
          %318 = vmatprep.subr.mxu0 0.0
          %319 = vmatpush1.msra.mxu0 0.0
          %320 = vmatprep.subr.mxu0 0.0
          %321 = vmatpush1.msra.mxu0 0.0
          %322 = vmatprep.subr.mxu0 0.0
          %323 = vmatpush1.msra.mxu0 0.0
          %324 = vmatprep.subr.mxu0 0.0
          %325 = vmatpush1.msra.mxu0 %v292
          %326 = vmatprep.subr.mxu0 0.0
          %327 = vmatpush2.msra.mxu0 0.0
          %328 = vmatprep.subr.mxu0 0.0
          %329 = vmatpush2.msra.mxu0 0.0
          %330 = vmatprep.subr.mxu0 0.0
          %331 = vmatpush2.msra.mxu0 0.0
          %332 = vmatprep.subr.mxu0 0.0
          %333 = vmatpush2.msra.mxu0 0.0
          %334 = vmatprep.subr.mxu0 0.0
          %335 = vmatpush2.msra.mxu0 0.0
          %336 = vmatprep.subr.mxu0 0.0
          %337 = vmatpush2.msra.mxu0 0.0
          %338 = vmatprep.subr.mxu0 0.0
          %339 = vmatpush2.msra.mxu0 0.0
          %340 = vmatprep.subr.mxu0 0.0
          %341 = vmatpush2.msra.mxu0 0.0
          %342 = vmatprep.subr.mxu0 0.0
          %343 = vmatpush2.msra.mxu0 0.0
          %344 = vmatprep.subr.mxu0 0.0
          %345 = vmatpush2.msra.mxu0 0.0
          %346 = vmatprep.subr.mxu0 0.0
          %347 = vmatpush2.msra.mxu0 0.0
          %348 = vmatprep.subr.mxu0 0.0
          %349 = vmatpush2.msra.mxu0 0.0
          %350 = vmatprep.subr.mxu0 0.0
          %351 = vmatpush2.msra.mxu0 0.0
          %352 = vmatprep.subr.mxu0 0.0
          %353 = vmatpush2.msra.mxu0 0.0
          %354 = vmatprep.subr.mxu0 0.0
          %355 = vmatpush2.msra.mxu0 0.0
          %356 = vmatprep.subr.mxu0 0.0
          %357 = vmatpush2.msra.mxu0 0.0
          %358 = vmatprep.mubr.f32.mxu0 0.0
          %359 = vmatmul.mubr.f32.gmra.mxu0 %v289
          %v360 = vpop.f32.mrf.mxu0
          %v361 = vadd.f32 0.0, %v360
          %v362 = vpop.f32.mrf.mxu0
          %363 = vdwg.mxu0
          %v365 = vsel %vm287, %v285, 0
          %v368 = vsel %vm276, %v280, 0
          %370 = vmatprep.subr.mxu0 0.0
          %371 = vmatpush1.msra.mxu0 0.0
          %372 = vmatprep.subr.mxu0 0.0
          %373 = vmatpush1.msra.mxu0 0.0
          %374 = vmatprep.subr.mxu0 0.0
          %375 = vmatpush1.msra.mxu0 0.0
          %376 = vmatprep.subr.mxu0 0.0
          %377 = vmatpush1.msra.mxu0 0.0
          %378 = vmatprep.subr.mxu0 0.0
          %379 = vmatpush1.msra.mxu0 0.0
          %380 = vmatprep.subr.mxu0 0.0
          %381 = vmatpush1.msra.mxu0 0.0
          %382 = vmatprep.subr.mxu0 0.0
          %383 = vmatpush1.msra.mxu0 0.0
          %384 = vmatprep.subr.mxu0 0.0
          %385 = vmatpush1.msra.mxu0 0.0
          %386 = vmatprep.subr.mxu0 0.0
          %387 = vmatpush1.msra.mxu0 0.0
          %388 = vmatprep.subr.mxu0 0.0
          %389 = vmatpush1.msra.mxu0 0.0
          %390 = vmatprep.subr.mxu0 0.0
          %391 = vmatpush1.msra.mxu0 0.0
          %392 = vmatprep.subr.mxu0 0.0
          %393 = vmatpush1.msra.mxu0 0.0
          %394 = vmatprep.subr.mxu0 0.0
          %395 = vmatpush1.msra.mxu0 0.0
          %396 = vmatprep.subr.mxu0 0.0
          %397 = vmatpush1.msra.mxu0 0.0
          %398 = vmatprep.subr.mxu0 0.0
          %399 = vmatpush1.msra.mxu0 0.0
          %400 = vmatprep.subr.mxu0 0.0
          %401 = vmatpush1.msra.mxu0 %v368
          %402 = vmatprep.subr.mxu0 0.0
          %403 = vmatpush2.msra.mxu0 0.0
          %404 = vmatprep.subr.mxu0 0.0
          %405 = vmatpush2.msra.mxu0 0.0
          %406 = vmatprep.subr.mxu0 0.0
          %407 = vmatpush2.msra.mxu0 0.0
          %408 = vmatprep.subr.mxu0 0.0
          %409 = vmatpush2.msra.mxu0 0.0
          %410 = vmatprep.subr.mxu0 0.0
          %411 = vmatpush2.msra.mxu0 0.0
          %412 = vmatprep.subr.mxu0 0.0
          %413 = vmatpush2.msra.mxu0 0.0
          %414 = vmatprep.subr.mxu0 0.0
          %415 = vmatpush2.msra.mxu0 0.0
          %416 = vmatprep.subr.mxu0 0.0
          %417 = vmatpush2.msra.mxu0 0.0
          %418 = vmatprep.subr.mxu0 0.0
          %419 = vmatpush2.msra.mxu0 0.0
          %420 = vmatprep.subr.mxu0 0.0
          %421 = vmatpush2.msra.mxu0 0.0
          %422 = vmatprep.subr.mxu0 0.0
          %423 = vmatpush2.msra.mxu0 0.0
          %424 = vmatprep.subr.mxu0 0.0
          %425 = vmatpush2.msra.mxu0 0.0
          %426 = vmatprep.subr.mxu0 0.0
          %427 = vmatpush2.msra.mxu0 0.0
          %428 = vmatprep.subr.mxu0 0.0
          %429 = vmatpush2.msra.mxu0 0.0
          %430 = vmatprep.subr.mxu0 0.0
          %431 = vmatpush2.msra.mxu0 0.0
          %432 = vmatprep.subr.mxu0 0.0
          %433 = vmatpush2.msra.mxu0 0.0
          %434 = vmatprep.mubr.f32.mxu0 0.0
          %435 = vmatmul.mubr.f32.gmra.mxu0 %v365
          %v436 = vpop.f32.mrf.mxu0
          %v437 = vadd.f32 %v361, %v436
          %v438 = vpop.f32.mrf.mxu0
          %439 = vdwg.mxu0
          %v440 = vxor.u32 %v437, 2147483648
          %v441 = vmul.f32 %v440, 1.442695
          %v442 = vpow.pop %v441
          %v443 = vadd.f32 %v442, 1.0
          %v444 = vrcp.pop %v443
          %v445 = vmul.f32 1.0, %v444
          %v446 = vld [vmem:[%s3] sm:$0xf]
          %v448 = vsel %vm287, %v446, 0
          %v451 = vsel %vm276, %v445, 0
          %453 = vmatprep.subr.mxu0 0.0
          %454 = vmatpush1.msra.mxu0 0.0
          %455 = vmatprep.subr.mxu0 0.0
          %456 = vmatpush1.msra.mxu0 0.0
          %457 = vmatprep.subr.mxu0 0.0
          %458 = vmatpush1.msra.mxu0 0.0
          %459 = vmatprep.subr.mxu0 0.0
          %460 = vmatpush1.msra.mxu0 0.0
          %461 = vmatprep.subr.mxu0 0.0
          %462 = vmatpush1.msra.mxu0 0.0
          %463 = vmatprep.subr.mxu0 0.0
          %464 = vmatpush1.msra.mxu0 0.0
          %465 = vmatprep.subr.mxu0 0.0
          %466 = vmatpush1.msra.mxu0 0.0
          %467 = vmatprep.subr.mxu0 0.0
          %468 = vmatpush1.msra.mxu0 0.0
          %469 = vmatprep.subr.mxu0 0.0
          %470 = vmatpush1.msra.mxu0 0.0
          %471 = vmatprep.subr.mxu0 0.0
          %472 = vmatpush1.msra.mxu0 0.0
          %473 = vmatprep.subr.mxu0 0.0
          %474 = vmatpush1.msra.mxu0 0.0
          %475 = vmatprep.subr.mxu0 0.0
          %476 = vmatpush1.msra.mxu0 0.0
          %477 = vmatprep.subr.mxu0 0.0
          %478 = vmatpush1.msra.mxu0 0.0
          %479 = vmatprep.subr.mxu0 0.0
          %480 = vmatpush1.msra.mxu0 0.0
          %481 = vmatprep.subr.mxu0 0.0
          %482 = vmatpush1.msra.mxu0 0.0
          %483 = vmatprep.subr.mxu0 0.0
          %484 = vmatpush1.msra.mxu0 %v451
          %485 = vmatprep.subr.mxu0 0.0
          %486 = vmatpush2.msra.mxu0 0.0
          %487 = vmatprep.subr.mxu0 0.0
          %488 = vmatpush2.msra.mxu0 0.0
          %489 = vmatprep.subr.mxu0 0.0
          %490 = vmatpush2.msra.mxu0 0.0
          %491 = vmatprep.subr.mxu0 0.0
          %492 = vmatpush2.msra.mxu0 0.0
          %493 = vmatprep.subr.mxu0 0.0
          %494 = vmatpush2.msra.mxu0 0.0
          %495 = vmatprep.subr.mxu0 0.0
          %496 = vmatpush2.msra.mxu0 0.0
          %497 = vmatprep.subr.mxu0 0.0
          %498 = vmatpush2.msra.mxu0 0.0
          %499 = vmatprep.subr.mxu0 0.0
          %500 = vmatpush2.msra.mxu0 0.0
          %501 = vmatprep.subr.mxu0 0.0
          %502 = vmatpush2.msra.mxu0 0.0
          %503 = vmatprep.subr.mxu0 0.0
          %504 = vmatpush2.msra.mxu0 0.0
          %505 = vmatprep.subr.mxu0 0.0
          %506 = vmatpush2.msra.mxu0 0.0
          %507 = vmatprep.subr.mxu0 0.0
          %508 = vmatpush2.msra.mxu0 0.0
          %509 = vmatprep.subr.mxu0 0.0
          %510 = vmatpush2.msra.mxu0 0.0
          %511 = vmatprep.subr.mxu0 0.0
          %512 = vmatpush2.msra.mxu0 0.0
          %513 = vmatprep.subr.mxu0 0.0
          %514 = vmatpush2.msra.mxu0 0.0
          %515 = vmatprep.subr.mxu0 0.0
          %516 = vmatpush2.msra.mxu0 0.0
          %517 = vmatprep.mubr.f32.mxu0 0.0
          %518 = vmatmul.mubr.f32.gmra.mxu0 %v448
          %v519 = vpop.f32.mrf.mxu0
          %v520 = vadd.f32 0.0, %v519
          %v521 = vpop.f32.mrf.mxu0
          %522 = vdwg.mxu0
          %v523 = vxor.u32 %v520, 2147483648
          %v524 = vmul.f32 %v523, 1.442695
          %v525 = vpow.pop %v524
          %v526 = vadd.f32 %v525, 1.0
          %v527 = vrcp.pop %v526
          %v528 = vmul.f32 1.0, %v527
          %vm529 = vcmask 3072
          %530 = vst.msk [vmem:[%s255] sm:$0xf] %vm529, %v528
        $region56: #{tpu_custom_call.1} parent=35 // pred_fallthru
          _
        %p531 = scmp.lt.s32.totalorder %s23, 1
        %s532 = scalar_select %p531, %s23, 1
        %s533 = smul.addr %s532, 4
        %s534 = scalar_lea.vmem %s4, %s533
        // Predicated region
        $region57: #{tpu_custom_call.1} parent=35 // pred_check
          %p535 = pneg %p140
        $region58: #{tpu_custom_call.1} parent=35 // pred_check_branch
          %537 = sbr.rel (%p535) target = $region60
        $region59: #{tpu_custom_call.1} parent=35 // pred_region
          _
        $region60: #{tpu_custom_call.1} parent=35 // pred_fallthru
          _
      $region36: #{tpu_custom_call.1} parent=5 // pred_fallthru
        _
      %p538 = scmp.le.s32.totalorder 2, %s14
      // Predicated region
      $region61: #{tpu_custom_call.1} parent=5 // pred_check
        %p539 = pneg %p538
      $region62: #{tpu_custom_call.1} parent=5 // pred_check_branch
        %541 = sbr.rel (%p539) target = $region64
      $region63: #{tpu_custom_call.1} parent=5 // pred_region
        %s542 = ssub.s32 %s14, 2
        // Predicated region
        $region65: #{tpu_custom_call.1} parent=63 // pred_check
          %p543 = pneg %p146
        $region66: #{tpu_custom_call.1} parent=63 // pred_check_branch
          %545 = sbr.rel (%p543) target = $region68
        $region67: #{tpu_custom_call.1} parent=63 // pred_region
          %p546 = scmp.lt.s32.totalorder %s25, 1
          %s547 = scalar_select %p546, %s25, 1
          %s548 = smul.addr %s547, 4
          %s549 = scalar_lea.vmem %s4, %s548
        $region68: #{tpu_custom_call.1} parent=63 // pred_fallthru
          _
      $region64: #{tpu_custom_call.1} parent=5 // pred_fallthru
        _
    $region6: #{tpu_custom_call.1} parent=1 // loop_footer
      %s18 = sadd.s32 1, %s14
    $region7: #{tpu_custom_call.1} parent=1 // loop_footer_branch
      %13 = sbr.rel target = $region3
    $region8: #{tpu_custom_call.1} parent=1 // loop_exit
      _
    %550 = vsyncpa [#allocation5], 1
    %s551 = scalar_lea.sflag [#allocation5], 1
    %552 = vsyncpa %s551, 1
    %553 = vsyncpa [#allocation7], 1

</llo_original>
